<compile_context>
chip_gen: v6e
topology: v6e:2x2x1
jax: 0.10.0
libtpu: 0.0.40
codegen_flags: <defaults>
</compile_context>

<pallas_src>
import jax
import jax.numpy as jnp
from jax.experimental import pallas as pl
from jax.experimental.pallas import tpu as pltpu

C_OUT = 3
NEG_SLOPE = 0.7
H = 16               # full spatial extent (lane-dense: 16*16 = 256 = 2*128)
HW = H * H           # 256


def _model_kernel(x_ref, wb_ref, x5_ref, pool_ref):
    # x_ref:    (N, 256)        f32 VMEM -- full 16x16 input, flat spatial (k = 16*h + w)
    # wb_ref:   (8,)            f32 SMEM -- [w0, w1, w2, b0, b1, b2, 0, 0]
    # x5_ref:   (N, C_OUT, 256) f32 VMEM -- leaky path on the full grid
    # pool_ref: (N, C_OUT, 256) f32 VMEM -- 0.25 * 2x2 window sums; valid at lanes
    #           k = 16*h + w with h, w odd <= 13; wrapper selects [1:15:2, 1:15:2].
    x = x_ref[...]                                               # (N, 256)

    # Pointwise transposed conv (k=1): one scalar*vector FMA per channel; all
    # downstream ops (where / pool / stores) are vectorized over channels.
    x1 = jnp.stack(
        [x * wb_ref[c] + wb_ref[C_OUT + c] for c in range(C_OUT)], axis=1
    )                                                            # (N, C, 256)

    # x5 = where(x1 > 0, x1, 0.7 * x1) -- lane-dense, unmasked stores.
    x5_ref[...] = jnp.where(x1 > 0, x1, NEG_SLOPE * x1)

    # AvgPool2d(2, stride=2) on the VPU/XLU (no MXU):
    #   s[k] = x1[k] + x1[k+1]      (W-neighbour sum)
    #   u[k] = s[k] + s[k+16]       (H-neighbour sum)
    # Roll wrap-around only contaminates lanes the wrapper never selects
    # (it only reads h, w in {1,3,...,13}).
    s = x1 + jnp.roll(x1, -1, axis=-1)
    u = s + jnp.roll(s, -H, axis=-1)
    pool_ref[...] = 0.25 * u
    # x8 = tanh(x5) is dead code in the reference forward; not materialized.


def model_forward(x4, weight, bias):
    """x4: (N, 1, 16, 16) f32; weight: (1, 3, 1, 1); bias: (3,). Returns (x7, x5) NCHW."""
    n = x4.shape[0]

    # Full-grid, lane-dense input (no crop here; pointwise conv commutes with crop).
    x_flat = x4[:, 0].reshape(n, HW).astype(jnp.float32)         # (N, 256)

    # Packed scalars for SMEM: [w0, w1, w2, b0, b1, b2, 0, 0].
    wb = jnp.concatenate(
        [weight[0, :, 0, 0].astype(jnp.float32),
         bias.astype(jnp.float32),
         jnp.zeros((2,), jnp.float32)]
    )                                                            # (8,)

    x5_full, pool_full = pl.pallas_call(
        _model_kernel,
        out_shape=(
            jax.ShapeDtypeStruct((n, C_OUT, HW), jnp.float32),   # x5 on full grid
            jax.ShapeDtypeStruct((n, C_OUT, HW), jnp.float32),   # pool sums on full grid
        ),
        in_specs=[
            pl.BlockSpec(memory_space=pltpu.MemorySpace.VMEM),   # x_flat
            pl.BlockSpec(memory_space=pltpu.MemorySpace.SMEM),   # packed scalars
        ],
        out_specs=(
            pl.BlockSpec(memory_space=pltpu.MemorySpace.VMEM),
            pl.BlockSpec(memory_space=pltpu.MemorySpace.VMEM),
        ),
    )(x_flat, wb)

    # Wrapper-side layout plumbing: reshape + static interior slices (no transposes).
    x5_full = x5_full.reshape(n, C_OUT, H, H)
    pool_full = pool_full.reshape(n, C_OUT, H, H)
    x5 = x5_full[:, :, 1:15, 1:15]                               # (N, 3, 14, 14)
    x7 = pool_full[:, :, 1:15:2, 1:15:2]                         # (N, 3, 7, 7)
    return x7, x5


if __name__ == "__main__":
    key = jax.random.PRNGKey(0)
    kx, kw, kb = jax.random.split(key, 3)

    x4 = jax.random.normal(kx, (8, 1, 16, 16), jnp.float32)
    # ConvTranspose2d(1, 3, 1): weight (in=1, out=3, 1, 1), bias (3,)
    weight = jax.random.normal(kw, (1, 3, 1, 1), jnp.float32) * 0.5
    bias = jax.random.normal(kb, (3,), jnp.float32) * 0.1

    x7, x5 = jax.jit(model_forward)(x4, weight, bias)
    jax.block_until_ready((x7, x5))

    # Pure-JAX reference for correctness check.
    xc = x4[:, :, 1:15, 1:15]                                             # (8,1,14,14)
    w00 = weight[0, :, 0, 0]                                              # (3,)
    x1_ref = xc[:, 0:1, :, :] * w00[None, :, None, None] + bias[None, :, None, None]
    x7_ref = x1_ref.reshape(8, 3, 7, 2, 7, 2).mean(axis=(3, 5))
    x5_ref = jnp.where(x1_ref > 0, x1_ref, 0.7 * x1_ref)

    assert x7.shape == (8, 3, 7, 7) and x5.shape == (8, 3, 14, 14)
    assert jnp.allclose(x7, x7_ref, atol=1e-4), "x7 (avg-pool path) mismatch"
    assert jnp.allclose(x5, x5_ref, atol=1e-5), "x5 (where path) mismatch"
    print("KERNEL_OK")
</pallas_src>

<mosaic_0001>
module attributes {stable_mosaic.version = 11 : i64} {
  func.func @_model_kernel(%arg0: memref<8x256xf32, #tpu.memory_space<vmem>>, %arg1: memref<8xf32, #tpu.memory_space<smem>>, %arg2: memref<8x3x256xf32, #tpu.memory_space<vmem>>, %arg3: memref<8x3x256xf32, #tpu.memory_space<vmem>>) attributes {dimension_semantics = [], scalar_prefetch = 0 : i64, scratch_operands = 0 : i64, tpu.core_type = #tpu.core_type<tc>} {
    %c0 = arith.constant 0 : index
    %c0_0 = arith.constant 0 : index
    %0 = vector.load %arg0[%c0, %c0_0] : memref<8x256xf32, #tpu.memory_space<vmem>>, vector<8x256xf32>
    %c0_1 = arith.constant 0 : index
    %1 = memref.load %arg1[%c0_1] : memref<8xf32, #tpu.memory_space<smem>>
    %2 = vector.broadcast %1 : f32 to vector<8x256xf32>
    %3 = arith.mulf %0, %2 : vector<8x256xf32>
    %c3 = arith.constant 3 : index
    %4 = memref.load %arg1[%c3] : memref<8xf32, #tpu.memory_space<smem>>
    %5 = vector.broadcast %4 : f32 to vector<8x256xf32>
    %6 = arith.addf %3, %5 : vector<8x256xf32>
    %c1 = arith.constant 1 : index
    %7 = memref.load %arg1[%c1] : memref<8xf32, #tpu.memory_space<smem>>
    %8 = vector.broadcast %7 : f32 to vector<8x256xf32>
    %9 = arith.mulf %0, %8 : vector<8x256xf32>
    %c4 = arith.constant 4 : index
    %10 = memref.load %arg1[%c4] : memref<8xf32, #tpu.memory_space<smem>>
    %11 = vector.broadcast %10 : f32 to vector<8x256xf32>
    %12 = arith.addf %9, %11 : vector<8x256xf32>
    %c2 = arith.constant 2 : index
    %13 = memref.load %arg1[%c2] : memref<8xf32, #tpu.memory_space<smem>>
    %14 = vector.broadcast %13 : f32 to vector<8x256xf32>
    %15 = arith.mulf %0, %14 : vector<8x256xf32>
    %c5 = arith.constant 5 : index
    %16 = memref.load %arg1[%c5] : memref<8xf32, #tpu.memory_space<smem>>
    %17 = vector.broadcast %16 : f32 to vector<8x256xf32>
    %18 = arith.addf %15, %17 : vector<8x256xf32>
    %19 = vector.shape_cast %6 : vector<8x256xf32> to vector<8x1x256xf32>
    %20 = vector.shape_cast %12 : vector<8x256xf32> to vector<8x1x256xf32>
    %21 = vector.shape_cast %18 : vector<8x256xf32> to vector<8x1x256xf32>
    %22 = tpu.concatenate %19, %20, %21 in 1 : vector<8x1x256xf32>, vector<8x1x256xf32>, vector<8x1x256xf32> -> vector<8x3x256xf32>
    %cst = arith.constant 0.000000e+00 : f32
    %23 = vector.broadcast %cst : f32 to vector<8x3x256xf32>
    %24 = arith.cmpf ogt, %22, %23 : vector<8x3x256xf32>
    %cst_2 = arith.constant 0.699999988 : f32
    %25 = vector.broadcast %cst_2 : f32 to vector<8x3x256xf32>
    %26 = arith.mulf %25, %22 : vector<8x3x256xf32>
    %27 = arith.select %24, %22, %26 : vector<8x3x256xi1>, vector<8x3x256xf32>
    %c0_3 = arith.constant 0 : index
    %c0_4 = arith.constant 0 : index
    %c0_5 = arith.constant 0 : index
    %28 = vector.load %arg2[%c0_3, %c0_4, %c0_5] : memref<8x3x256xf32, #tpu.memory_space<vmem>>, vector<8x3x256xf32>
    tpu.vector_store %arg2[%c0_3, %c0_4, %c0_5], %27 {strides = array<i32>} : memref<8x3x256xf32, #tpu.memory_space<vmem>>, vector<8x3x256xf32>,
    %29 = vector.extract_strided_slice %22 {offsets = [0, 0, 1], sizes = [8, 3, 255], strides = [1, 1, 1]} : vector<8x3x256xf32> to vector<8x3x255xf32>
    %30 = vector.extract_strided_slice %22 {offsets = [0, 0, 0], sizes = [8, 3, 1], strides = [1, 1, 1]} : vector<8x3x256xf32> to vector<8x3x1xf32>
    %31 = tpu.concatenate %29, %30 in 2 : vector<8x3x255xf32>, vector<8x3x1xf32> -> vector<8x3x256xf32>
    %32 = arith.addf %22, %31 : vector<8x3x256xf32>
    %33 = vector.extract_strided_slice %32 {offsets = [0, 0, 16], sizes = [8, 3, 240], strides = [1, 1, 1]} : vector<8x3x256xf32> to vector<8x3x240xf32>
    %34 = vector.extract_strided_slice %32 {offsets = [0, 0, 0], sizes = [8, 3, 16], strides = [1, 1, 1]} : vector<8x3x256xf32> to vector<8x3x16xf32>
    %35 = tpu.concatenate %33, %34 in 2 : vector<8x3x240xf32>, vector<8x3x16xf32> -> vector<8x3x256xf32>
    %36 = arith.addf %32, %35 : vector<8x3x256xf32>
    %cst_6 = arith.constant 2.500000e-01 : f32
    %37 = vector.broadcast %cst_6 : f32 to vector<8x3x256xf32>
    %38 = arith.mulf %37, %36 : vector<8x3x256xf32>
    %c0_7 = arith.constant 0 : index
    %c0_8 = arith.constant 0 : index
    %c0_9 = arith.constant 0 : index
    %39 = vector.load %arg3[%c0_7, %c0_8, %c0_9] : memref<8x3x256xf32, #tpu.memory_space<vmem>>, vector<8x3x256xf32>
    tpu.vector_store %arg3[%c0_7, %c0_8, %c0_9], %38 {strides = array<i32>} : memref<8x3x256xf32, #tpu.memory_space<vmem>>, vector<8x3x256xf32>,
    return
  }
}

</mosaic_0001>

<llo_original>
// kernel: squeeze.2
$region0: #{squeeze.2}
  %s0 = inlined_call_operand.hbm [shape: f32[8,1,16,16], index: 0, kind: input, shape index: {}]
  %s1 = inlined_call_operand.vmem [shape: f32[8,256], index: 1, kind: output, shape index: {}]
  $region1: #{squeeze.2} parent=0
    #allocation0 [shape = 'u8[65536]{0}', space=vmem, size = 0x10000, scoped, tag = 'operand span for operand 0']
    #allocation1 [shape = 's32[1]{0}', space=sflag, size = 0x4, scoped, tag = 'scoped memory for squeeze.2']
    %2 = vsyncpa [#allocation1], 0
    %s4 = ssub.s32 2048, 2048
    %5 = vsyncadd [#allocation1], %s4
    %s7 = sshll.u32 [#allocation0], 4
    %s8 = int_to_ptr.vmem [resolvable:$true] %s7
    %10 = dma.hbm_to_vmem [thread:$0]  %s0, 2048, %s8, [#allocation1]
    %11 = dma.done [#allocation1], 2048
    %v12 = vld [vmem:[#allocation0] ss:$8 sm:$0xf]
    %v13 = vld [vmem:[#allocation0] ss:$8 sm:$0xf0]
    %vm14 = vcmask 1047556
    %v15 = vsel %vm14, %v13, %v12
    %vm16 = vcmask 130048
    %17 = vst.msk [vmem:[%s1] ss:$8 sm:$0x3] %vm16, %v15
    %s18 = scalar_lea.vmem %s1, 4294967281
    %19 = vst.msk [vmem:[%s18] ss:$8 sm:$0xc] %vm16, %v15
    %s20 = scalar_lea.vmem %s1, 4294967266
    %21 = vst.msk [vmem:[%s20] ss:$8 sm:$0x30] %vm16, %v15
    %s22 = scalar_lea.vmem %s1, 4294967251
    %23 = vst.msk [vmem:[%s22] ss:$8 sm:$0xc0] %vm16, %v15
    %s24 = scalar_lea.vmem [#allocation0], 64
    %v25 = vld [vmem:[%s24] ss:$8 sm:$0xf]
    %s26 = scalar_lea.vmem [#allocation0], 64
    %v27 = vld [vmem:[%s26] ss:$8 sm:$0xf0]
    %vm28 = vcmask 1047556
    %v29 = vsel %vm28, %v27, %v25
    %vm30 = vcmask 130048
    %s31 = scalar_lea.vmem %s1, 4
    %32 = vst.msk [vmem:[%s31] ss:$8 sm:$0x3] %vm30, %v29
    %s33 = scalar_lea.vmem %s1, 4294967285
    %34 = vst.msk [vmem:[%s33] ss:$8 sm:$0xc] %vm30, %v29
    %s35 = scalar_lea.vmem %s1, 4294967270
    %36 = vst.msk [vmem:[%s35] ss:$8 sm:$0x30] %vm30, %v29
    %s37 = scalar_lea.vmem %s1, 4294967255
    %38 = vst.msk [vmem:[%s37] ss:$8 sm:$0xc0] %vm30, %v29
    %s39 = scalar_lea.vmem [#allocation0], 7
    %s40 = smov 3
    %v41 = vld [vmem:[%s39] ss:$16 sm:%s40]
    %s42 = scalar_lea.vmem [#allocation0], 7
    %s43 = smov 12
    %v44 = vld [vmem:[%s42] ss:$16 sm:%s43]
    %vm45 = vcmask 1043458
    %v46 = vsel %vm45, %v44, %v41
    %s47 = scalar_lea.vmem [#allocation0], 7
    %s48 = smov 48
    %v49 = vld [vmem:[%s47] ss:$16 sm:%s48]
    %vm50 = vcmask 1045508
    %v51 = vsel %vm50, %v49, %v46
    %s52 = scalar_lea.vmem [#allocation0], 7
    %s53 = smov 192
    %v54 = vld [vmem:[%s52] ss:$16 sm:%s53]
    %vm55 = vcmask 1047558
    %v56 = vsel %vm55, %v54, %v51
    %57 = vrot.lane.b32.xlu0 %v56, 112
    %v58 = vpop.permute.xlu0 %57
    %vm59 = vcmask 1048448
    %60 = vst.msk [vmem:[%s1] sm:$0xff] %vm59, %v58
    %s61 = scalar_lea.vmem [#allocation0], 15
    %s62 = smov 3
    %v63 = vld [vmem:[%s61] ss:$16 sm:%s62]
    %s64 = scalar_lea.vmem [#allocation0], 15
    %s65 = smov 12
    %v66 = vld [vmem:[%s64] ss:$16 sm:%s65]
    %vm67 = vcmask 1043458
    %v68 = vsel %vm67, %v66, %v63
    %s69 = scalar_lea.vmem [#allocation0], 15
    %s70 = smov 48
    %v71 = vld [vmem:[%s69] ss:$16 sm:%s70]
    %vm72 = vcmask 1045508
    %v73 = vsel %vm72, %v71, %v68
    %s74 = scalar_lea.vmem [#allocation0], 15
    %s75 = smov 192
    %v76 = vld [vmem:[%s74] ss:$16 sm:%s75]
    %vm77 = vcmask 1047558
    %v78 = vsel %vm77, %v76, %v73
    %79 = vrot.lane.b32.xlu0 %v78, 112
    %v80 = vpop.permute.xlu0 %79
    %vm81 = vcmask 1048448
    %s82 = scalar_lea.vmem %s1, 8
    %83 = vst.msk [vmem:[%s82] sm:$0xff] %vm81, %v80
    %s84 = scalar_lea.vmem [#allocation0], 6
    %s85 = smov 3
    %v86 = vld [vmem:[%s84] ss:$16 sm:%s85]
    %s87 = scalar_lea.vmem [#allocation0], 6
    %s88 = smov 12
    %v89 = vld [vmem:[%s87] ss:$16 sm:%s88]
    %vm90 = vcmask 1043458
    %v91 = vsel %vm90, %v89, %v86
    %s92 = scalar_lea.vmem [#allocation0], 6
    %s93 = smov 48
    %v94 = vld [vmem:[%s92] ss:$16 sm:%s93]
    %vm95 = vcmask 1045508
    %v96 = vsel %vm95, %v94, %v91
    %s97 = scalar_lea.vmem [#allocation0], 6
    %s98 = smov 192
    %v99 = vld [vmem:[%s97] ss:$16 sm:%s98]
    %vm100 = vcmask 1047558
    %v101 = vsel %vm100, %v99, %v96
    %102 = vrot.lane.b32.xlu0 %v101, 96
    %v103 = vpop.permute.xlu0 %102
    %vm104 = vcmask 917248
    %105 = vst.msk [vmem:[%s1] sm:$0xff] %vm104, %v103
    %s106 = scalar_lea.vmem [#allocation0], 14
    %s107 = smov 3
    %v108 = vld [vmem:[%s106] ss:$16 sm:%s107]
    %s109 = scalar_lea.vmem [#allocation0], 14
    %s110 = smov 12
    %v111 = vld [vmem:[%s109] ss:$16 sm:%s110]
    %vm112 = vcmask 1043458
    %v113 = vsel %vm112, %v111, %v108
    %s114 = scalar_lea.vmem [#allocation0], 14
    %s115 = smov 48
    %v116 = vld [vmem:[%s114] ss:$16 sm:%s115]
    %vm117 = vcmask 1045508
    %v118 = vsel %vm117, %v116, %v113
    %s119 = scalar_lea.vmem [#allocation0], 14
    %s120 = smov 192
    %v121 = vld [vmem:[%s119] ss:$16 sm:%s120]
    %vm122 = vcmask 1047558
    %v123 = vsel %vm122, %v121, %v118
    %124 = vrot.lane.b32.xlu0 %v123, 96
    %v125 = vpop.permute.xlu0 %124
    %vm126 = vcmask 917248
    %s127 = scalar_lea.vmem %s1, 8
    %128 = vst.msk [vmem:[%s127] sm:$0xff] %vm126, %v125
    %s129 = scalar_lea.vmem [#allocation0], 5
    %s130 = smov 3
    %v131 = vld [vmem:[%s129] ss:$16 sm:%s130]
    %s132 = scalar_lea.vmem [#allocation0], 5
    %s133 = smov 12
    %v134 = vld [vmem:[%s132] ss:$16 sm:%s133]
    %vm135 = vcmask 1043458
    %v136 = vsel %vm135, %v134, %v131
    %s137 = scalar_lea.vmem [#allocation0], 5
    %s138 = smov 48
    %v139 = vld [vmem:[%s137] ss:$16 sm:%s138]
    %vm140 = vcmask 1045508
    %v141 = vsel %vm140, %v139, %v136
    %s142 = scalar_lea.vmem [#allocation0], 5
    %s143 = smov 192
    %v144 = vld [vmem:[%s142] ss:$16 sm:%s143]
    %vm145 = vcmask 1047558
    %v146 = vsel %vm145, %v144, %v141
    %147 = vrot.lane.b32.xlu0 %v146, 80
    %v148 = vpop.permute.xlu0 %147
    %vm149 = vcmask 786048
    %150 = vst.msk [vmem:[%s1] sm:$0xff] %vm149, %v148
    %s151 = scalar_lea.vmem [#allocation0], 13
    %s152 = smov 3
    %v153 = vld [vmem:[%s151] ss:$16 sm:%s152]
    %s154 = scalar_lea.vmem [#allocation0], 13
    %s155 = smov 12
    %v156 = vld [vmem:[%s154] ss:$16 sm:%s155]
    %vm157 = vcmask 1043458
    %v158 = vsel %vm157, %v156, %v153
    %s159 = scalar_lea.vmem [#allocation0], 13
    %s160 = smov 48
    %v161 = vld [vmem:[%s159] ss:$16 sm:%s160]
    %vm162 = vcmask 1045508
    %v163 = vsel %vm162, %v161, %v158
    %s164 = scalar_lea.vmem [#allocation0], 13
    %s165 = smov 192
    %v166 = vld [vmem:[%s164] ss:$16 sm:%s165]
    %vm167 = vcmask 1047558
    %v168 = vsel %vm167, %v166, %v163
    %169 = vrot.lane.b32.xlu0 %v168, 80
    %v170 = vpop.permute.xlu0 %169
    %vm171 = vcmask 786048
    %s172 = scalar_lea.vmem %s1, 8
    %173 = vst.msk [vmem:[%s172] sm:$0xff] %vm171, %v170
    %s174 = scalar_lea.vmem [#allocation0], 4
    %s175 = smov 3
    %v176 = vld [vmem:[%s174] ss:$16 sm:%s175]
    %s177 = scalar_lea.vmem [#allocation0], 4
    %s178 = smov 12
    %v179 = vld [vmem:[%s177] ss:$16 sm:%s178]
    %vm180 = vcmask 1043458
    %v181 = vsel %vm180, %v179, %v176
    %s182 = scalar_lea.vmem [#allocation0], 4
    %s183 = smov 48
    %v184 = vld [vmem:[%s182] ss:$16 sm:%s183]
    %vm185 = vcmask 1045508
    %v186 = vsel %vm185, %v184, %v181
    %s187 = scalar_lea.vmem [#allocation0], 4
    %s188 = smov 192
    %v189 = vld [vmem:[%s187] ss:$16 sm:%s188]
    %vm190 = vcmask 1047558
    %v191 = vsel %vm190, %v189, %v186
    %192 = vrot.lane.b32.xlu0 %v191, 64
    %v193 = vpop.permute.xlu0 %192
    %vm194 = vcmask 654848
    %195 = vst.msk [vmem:[%s1] sm:$0xff] %vm194, %v193
    %s196 = scalar_lea.vmem [#allocation0], 12
    %s197 = smov 3
    %v198 = vld [vmem:[%s196] ss:$16 sm:%s197]
    %s199 = scalar_lea.vmem [#allocation0], 12
    %s200 = smov 12
    %v201 = vld [vmem:[%s199] ss:$16 sm:%s200]
    %vm202 = vcmask 1043458
    %v203 = vsel %vm202, %v201, %v198
    %s204 = scalar_lea.vmem [#allocation0], 12
    %s205 = smov 48
    %v206 = vld [vmem:[%s204] ss:$16 sm:%s205]
    %vm207 = vcmask 1045508
    %v208 = vsel %vm207, %v206, %v203
    %s209 = scalar_lea.vmem [#allocation0], 12
    %s210 = smov 192
    %v211 = vld [vmem:[%s209] ss:$16 sm:%s210]
    %vm212 = vcmask 1047558
    %v213 = vsel %vm212, %v211, %v208
    %214 = vrot.lane.b32.xlu0 %v213, 64
    %v215 = vpop.permute.xlu0 %214
    %vm216 = vcmask 654848
    %s217 = scalar_lea.vmem %s1, 8
    %218 = vst.msk [vmem:[%s217] sm:$0xff] %vm216, %v215
    %s219 = scalar_lea.vmem [#allocation0], 3
    %s220 = smov 3
    %v221 = vld [vmem:[%s219] ss:$16 sm:%s220]
    %s222 = scalar_lea.vmem [#allocation0], 3
    %s223 = smov 12
    %v224 = vld [vmem:[%s222] ss:$16 sm:%s223]
    %vm225 = vcmask 1043458
    %v226 = vsel %vm225, %v224, %v221
    %s227 = scalar_lea.vmem [#allocation0], 3
    %s228 = smov 48
    %v229 = vld [vmem:[%s227] ss:$16 sm:%s228]
    %vm230 = vcmask 1045508
    %v231 = vsel %vm230, %v229, %v226
    %s232 = scalar_lea.vmem [#allocation0], 3
    %s233 = smov 192
    %v234 = vld [vmem:[%s232] ss:$16 sm:%s233]
    %vm235 = vcmask 1047558
    %v236 = vsel %vm235, %v234, %v231
    %237 = vrot.lane.b32.xlu0 %v236, 48
    %v238 = vpop.permute.xlu0 %237
    %vm239 = vcmask 523648
    %240 = vst.msk [vmem:[%s1] sm:$0xff] %vm239, %v238
    %s241 = scalar_lea.vmem [#allocation0], 11
    %s242 = smov 3
    %v243 = vld [vmem:[%s241] ss:$16 sm:%s242]
    %s244 = scalar_lea.vmem [#allocation0], 11
    %s245 = smov 12
    %v246 = vld [vmem:[%s244] ss:$16 sm:%s245]
    %vm247 = vcmask 1043458
    %v248 = vsel %vm247, %v246, %v243
    %s249 = scalar_lea.vmem [#allocation0], 11
    %s250 = smov 48
    %v251 = vld [vmem:[%s249] ss:$16 sm:%s250]
    %vm252 = vcmask 1045508
    %v253 = vsel %vm252, %v251, %v248
    %s254 = scalar_lea.vmem [#allocation0], 11
    %s255 = smov 192
    %v256 = vld [vmem:[%s254] ss:$16 sm:%s255]
    %vm257 = vcmask 1047558
    %v258 = vsel %vm257, %v256, %v253
    %259 = vrot.lane.b32.xlu0 %v258, 48
    %v260 = vpop.permute.xlu0 %259
    %vm261 = vcmask 523648
    %s262 = scalar_lea.vmem %s1, 8
    %263 = vst.msk [vmem:[%s262] sm:$0xff] %vm261, %v260
    %s264 = scalar_lea.vmem [#allocation0], 2
    %s265 = smov 3
    %v266 = vld [vmem:[%s264] ss:$16 sm:%s265]
    %s267 = scalar_lea.vmem [#allocation0], 2
    %s268 = smov 12
    %v269 = vld [vmem:[%s267] ss:$16 sm:%s268]
    %vm270 = vcmask 1043458
    %v271 = vsel %vm270, %v269, %v266
    %s272 = scalar_lea.vmem [#allocation0], 2
    %s273 = smov 48
    %v274 = vld [vmem:[%s272] ss:$16 sm:%s273]
    %vm275 = vcmask 1045508
    %v276 = vsel %vm275, %v274, %v271
    %s277 = scalar_lea.vmem [#allocation0], 2
    %s278 = smov 192
    %v279 = vld [vmem:[%s277] ss:$16 sm:%s278]
    %vm280 = vcmask 1047558
    %v281 = vsel %vm280, %v279, %v276
    %282 = vrot.lane.b32.xlu0 %v281, 32
    %v283 = vpop.permute.xlu0 %282
    %vm284 = vcmask 392448
    %285 = vst.msk [vmem:[%s1] sm:$0xff] %vm284, %v283
    %s286 = scalar_lea.vmem [#allocation0], 10
    %s287 = smov 3
    %v288 = vld [vmem:[%s286] ss:$16 sm:%s287]
    %s289 = scalar_lea.vmem [#allocation0], 10
    %s290 = smov 12
    %v291 = vld [vmem:[%s289] ss:$16 sm:%s290]
    %vm292 = vcmask 1043458
    %v293 = vsel %vm292, %v291, %v288
    %s294 = scalar_lea.vmem [#allocation0], 10
    %s295 = smov 48
    %v296 = vld [vmem:[%s294] ss:$16 sm:%s295]
    %vm297 = vcmask 1045508
    %v298 = vsel %vm297, %v296, %v293
    %s299 = scalar_lea.vmem [#allocation0], 10
    %s300 = smov 192
    %v301 = vld [vmem:[%s299] ss:$16 sm:%s300]
    %vm302 = vcmask 1047558
    %v303 = vsel %vm302, %v301, %v298
    %304 = vrot.lane.b32.xlu0 %v303, 32
    %v305 = vpop.permute.xlu0 %304
    %vm306 = vcmask 392448
    %s307 = scalar_lea.vmem %s1, 8
    %308 = vst.msk [vmem:[%s307] sm:$0xff] %vm306, %v305
    %s309 = scalar_lea.vmem [#allocation0], 1
    %s310 = smov 3
    %v311 = vld [vmem:[%s309] ss:$16 sm:%s310]
    %s312 = scalar_lea.vmem [#allocation0], 1
    %s313 = smov 12
    %v314 = vld [vmem:[%s312] ss:$16 sm:%s313]
    %vm315 = vcmask 1043458
    %v316 = vsel %vm315, %v314, %v311
    %s317 = scalar_lea.vmem [#allocation0], 1
    %s318 = smov 48
    %v319 = vld [vmem:[%s317] ss:$16 sm:%s318]
    %vm320 = vcmask 1045508
    %v321 = vsel %vm320, %v319, %v316
    %s322 = scalar_lea.vmem [#allocation0], 1
    %s323 = smov 192
    %v324 = vld [vmem:[%s322] ss:$16 sm:%s323]
    %vm325 = vcmask 1047558
    %v326 = vsel %vm325, %v324, %v321
    %327 = vrot.lane.b32.xlu0 %v326, 16
    %v328 = vpop.permute.xlu0 %327
    %vm329 = vcmask 261248
    %330 = vst.msk [vmem:[%s1] sm:$0xff] %vm329, %v328
    %s331 = scalar_lea.vmem [#allocation0], 9
    %s332 = smov 3
    %v333 = vld [vmem:[%s331] ss:$16 sm:%s332]
    %s334 = scalar_lea.vmem [#allocation0], 9
    %s335 = smov 12
    %v336 = vld [vmem:[%s334] ss:$16 sm:%s335]
    %vm337 = vcmask 1043458
    %v338 = vsel %vm337, %v336, %v333
    %s339 = scalar_lea.vmem [#allocation0], 9
    %s340 = smov 48
    %v341 = vld [vmem:[%s339] ss:$16 sm:%s340]
    %vm342 = vcmask 1045508
    %v343 = vsel %vm342, %v341, %v338
    %s344 = scalar_lea.vmem [#allocation0], 9
    %s345 = smov 192
    %v346 = vld [vmem:[%s344] ss:$16 sm:%s345]
    %vm347 = vcmask 1047558
    %v348 = vsel %vm347, %v346, %v343
    %349 = vrot.lane.b32.xlu0 %v348, 16
    %v350 = vpop.permute.xlu0 %349
    %vm351 = vcmask 261248
    %s352 = scalar_lea.vmem %s1, 8
    %353 = vst.msk [vmem:[%s352] sm:$0xff] %vm351, %v350
    %354 = vsyncpa [#allocation1], 1

// kernel: model_forward.1
$region0: #{model_forward.1}
  #allocation0 [shape = 'u32[]', space=smem, size = 0x4, offset = 0x4, fixed_abs, tag = 'smem constant byte address 0x4 - core index']
  #allocation1 [shape = 'u32[144,128]{1,0:T(1,128)}', space=vmem, size = 0x12000, scoped, tag = 'internal scratch']
  %s0 = inlined_call_operand.vmem [shape: f32[8,256], index: 0, kind: input, shape index: {}]
  %s1 = inlined_call_operand.vmem [shape: f32[8], index: 1, kind: input, shape index: {}]
  %s2 = inlined_call_operand.vmem [shape: f32[8,3,256], index: 2, kind: output, shape index: {0}]
  %s3 = inlined_call_operand.vmem [shape: f32[8,3,256], index: 3, kind: output, shape index: {1}]
  %4 = xla_tuple %s2, %s3
  %s5 = sld [smem:[#allocation0]]
  $region30: #{model_forward.1} parent=0
    _
  %s7 = ssub.s32 1, %s5
  %s8 = scalar_select 0, %s7, %s5
  $region1: #{model_forward.1} parent=0
    #allocation2 [shape = 'u8[512]{0}', space=smem, size = 0x200, scoped, tag = 'input window, operand 1, single buffered']
    #allocation3 [shape = 's32[1]{0}', space=sflag, size = 0x4, scoped, tag = 'scoped memory for model_forward.1']
    %9 = vsyncpa [#allocation3], 0
    // Predicated region
    $region2: #{model_forward.1} parent=1 // pred_check
      _
    $region3: #{model_forward.1} parent=1 // pred_check_branch
      %11 = sbr.rel (0) target = $region5
    $region4: #{model_forward.1} parent=1 // pred_region
      _
    $region5: #{model_forward.1} parent=1 // pred_fallthru
      _
    // Predicated region
    $region6: #{model_forward.1} parent=1 // pred_check
      _
    $region7: #{model_forward.1} parent=1 // pred_check_branch
      %13 = sbr.rel (0) target = $region9
    $region8: #{model_forward.1} parent=1 // pred_region
      %s15 = ssub.s32 16, 16
      %16 = vsyncadd [#allocation3], %s15
      %s18 = sshll.u32 %s1, 4
      %s19 = int_to_ptr.vmem [resolvable:$true] %s18
      %21 = dma.vmem_to_smem %s19, 16, [#allocation2], [#allocation3]
    $region9: #{model_forward.1} parent=1 // pred_fallthru
      _
    // Predicated region
    $region10: #{model_forward.1} parent=1 // pred_check
      _
    $region11: #{model_forward.1} parent=1 // pred_check_branch
      %23 = sbr.rel (0) target = $region13
    $region12: #{model_forward.1} parent=1 // pred_region
      %24 = dma.done [#allocation3], 16
    $region13: #{model_forward.1} parent=1 // pred_fallthru
      _
    %25 = sfence
    %v26 = vld [vmem:[%s0] sm:$0xff]
    %v27 = vld [vmem:[%s0 + $0x8] sm:$0xff]
    %s28 = sld [smem:[#allocation2]]
    %v29 = vstv %s28
    %v30 = vmul.f32 %v26, %v29
    %v31 = vmul.f32 %v27, %v29
    %s32 = sld [smem:[#allocation2 + $0x3]]
    %v33 = vstv %s32
    %v34 = vadd.f32 %v30, %v33
    %v35 = vadd.f32 %v31, %v33
    %s36 = sld [smem:[#allocation2 + $0x1]]
    %v37 = vstv %s36
    %v38 = vmul.f32 %v26, %v37
    %v39 = vmul.f32 %v27, %v37
    %s40 = sld [smem:[#allocation2 + $0x4]]
    %v41 = vstv %s40
    %v42 = vadd.f32 %v38, %v41
    %v43 = vadd.f32 %v39, %v41
    %s44 = sld [smem:[#allocation2 + $0x2]]
    %v45 = vstv %s44
    %v46 = vmul.f32 %v26, %v45
    %v47 = vmul.f32 %v27, %v45
    %s48 = sld [smem:[#allocation2 + $0x5]]
    %v49 = vstv %s48
    %v50 = vadd.f32 %v46, %v49
    %v51 = vadd.f32 %v47, %v49
    %v54 = vcombine.low %v34, %v35
    %v55 = vcombine.high %v34, %v35
    %v57 = vunpack.c.l.s4 1966171168
    %v58 = vunpack.c.0.s8 %v57
    %v59 = vlaneseq
    %v60 = vshrl.u32 %v59, 7
    %v61 = vsub.s32 %v58, %v60
    %v62 = vrot.slane %v54, %v61
    %v64 = vunpack.c.l.s4 1966171168
    %v65 = vunpack.c.0.s8 %v64
    %v66 = vlaneseq
    %v67 = vshrl.u32 %v66, 7
    %v68 = vsub.s32 %v65, %v67
    %v69 = vrot.slane %v55, %v68
    %v70 = vcombine.high %v62, %v62
    %v71 = vcombine.high %v69, %v69
    %v73 = vunpack.c.l.s4 1966171168
    %v74 = vunpack.c.0.s8 %v73
    %v75 = vlaneseq
    %v76 = vshrl.u32 %v75, 7
    %v77 = vsub.s32 %v74, %v76
    %v78 = vrot.slane %v62, %v77
    %v80 = vunpack.c.l.s4 1966171168
    %v81 = vunpack.c.0.s8 %v80
    %v82 = vlaneseq
    %v83 = vshrl.u32 %v82, 7
    %v84 = vsub.s32 %v81, %v83
    %v85 = vrot.slane %v69, %v84
    %v87 = vunpack.c.l.s4 1966171168
    %v88 = vunpack.c.0.s8 %v87
    %v89 = vlaneseq
    %v90 = vshrl.u32 %v89, 7
    %v91 = vsub.s32 %v88, %v90
    %v92 = vrot.slane %v70, %v91
    %v94 = vunpack.c.l.s4 1966171168
    %v95 = vunpack.c.0.s8 %v94
    %v96 = vlaneseq
    %v97 = vshrl.u32 %v96, 7
    %v98 = vsub.s32 %v95, %v97
    %v99 = vrot.slane %v71, %v98
    %v100 = vcombine.high %v78, %v78
    %v101 = vcombine.high %v85, %v85
    %v102 = vcombine.high %v92, %v92
    %v103 = vcombine.high %v99, %v99
    %v106 = vcombine.low %v42, %v43
    %v107 = vcombine.high %v42, %v43
    %v109 = vunpack.c.l.s4 1966171168
    %v110 = vunpack.c.0.s8 %v109
    %v111 = vlaneseq
    %v112 = vshrl.u32 %v111, 7
    %v113 = vsub.s32 %v110, %v112
    %v114 = vrot.slane %v106, %v113
    %v116 = vunpack.c.l.s4 1966171168
    %v117 = vunpack.c.0.s8 %v116
    %v118 = vlaneseq
    %v119 = vshrl.u32 %v118, 7
    %v120 = vsub.s32 %v117, %v119
    %v121 = vrot.slane %v107, %v120
    %v122 = vcombine.high %v114, %v114
    %v123 = vcombine.high %v121, %v121
    %v125 = vunpack.c.l.s4 1966171168
    %v126 = vunpack.c.0.s8 %v125
    %v127 = vlaneseq
    %v128 = vshrl.u32 %v127, 7
    %v129 = vsub.s32 %v126, %v128
    %v130 = vrot.slane %v114, %v129
    %v132 = vunpack.c.l.s4 1966171168
    %v133 = vunpack.c.0.s8 %v132
    %v134 = vlaneseq
    %v135 = vshrl.u32 %v134, 7
    %v136 = vsub.s32 %v133, %v135
    %v137 = vrot.slane %v121, %v136
    %v139 = vunpack.c.l.s4 1966171168
    %v140 = vunpack.c.0.s8 %v139
    %v141 = vlaneseq
    %v142 = vshrl.u32 %v141, 7
    %v143 = vsub.s32 %v140, %v142
    %v144 = vrot.slane %v122, %v143
    %v146 = vunpack.c.l.s4 1966171168
    %v147 = vunpack.c.0.s8 %v146
    %v148 = vlaneseq
    %v149 = vshrl.u32 %v148, 7
    %v150 = vsub.s32 %v147, %v149
    %v151 = vrot.slane %v123, %v150
    %v152 = vcombine.high %v130, %v130
    %v153 = vcombine.high %v137, %v137
    %v154 = vcombine.high %v144, %v144
    %v155 = vcombine.high %v151, %v151
    %v158 = vcombine.low %v50, %v51
    %v159 = vcombine.high %v50, %v51
    %v161 = vunpack.c.l.s4 1966171168
    %v162 = vunpack.c.0.s8 %v161
    %v163 = vlaneseq
    %v164 = vshrl.u32 %v163, 7
    %v165 = vsub.s32 %v162, %v164
    %v166 = vrot.slane %v158, %v165
    %v168 = vunpack.c.l.s4 1966171168
    %v169 = vunpack.c.0.s8 %v168
    %v170 = vlaneseq
    %v171 = vshrl.u32 %v170, 7
    %v172 = vsub.s32 %v169, %v171
    %v173 = vrot.slane %v159, %v172
    %v174 = vcombine.high %v166, %v166
    %v175 = vcombine.high %v173, %v173
    %v177 = vunpack.c.l.s4 1966171168
    %v178 = vunpack.c.0.s8 %v177
    %v179 = vlaneseq
    %v180 = vshrl.u32 %v179, 7
    %v181 = vsub.s32 %v178, %v180
    %v182 = vrot.slane %v166, %v181
    %v184 = vunpack.c.l.s4 1966171168
    %v185 = vunpack.c.0.s8 %v184
    %v186 = vlaneseq
    %v187 = vshrl.u32 %v186, 7
    %v188 = vsub.s32 %v185, %v187
    %v189 = vrot.slane %v173, %v188
    %v191 = vunpack.c.l.s4 1966171168
    %v192 = vunpack.c.0.s8 %v191
    %v193 = vlaneseq
    %v194 = vshrl.u32 %v193, 7
    %v195 = vsub.s32 %v192, %v194
    %v196 = vrot.slane %v174, %v195
    %v198 = vunpack.c.l.s4 1966171168
    %v199 = vunpack.c.0.s8 %v198
    %v200 = vlaneseq
    %v201 = vshrl.u32 %v200, 7
    %v202 = vsub.s32 %v199, %v201
    %v203 = vrot.slane %v175, %v202
    %v204 = vcombine.high %v182, %v182
    %v205 = vcombine.high %v189, %v189
    %v206 = vcombine.high %v196, %v196
    %v207 = vcombine.high %v203, %v203
    %v208 = vlaneseq
    %v209 = vshrl.u32 %v208, 7
    %v210 = vsub.s32 0, %v209
    %v211 = vrot.slane %v78, %v210
    %v212 = vlaneseq
    %v213 = vshrl.u32 %v212, 7
    %v214 = vsub.s32 1, %v213
    %v215 = vrot.slane %v78, %v214
    %v216 = vlaneseq
    %v217 = vshrl.u32 %v216, 7
    %v218 = vsub.s32 0, %v217
    %v219 = vrot.slane %v92, %v218
    %v220 = vlaneseq
    %v221 = vshrl.u32 %v220, 7
    %v222 = vsub.s32 1, %v221
    %v223 = vrot.slane %v92, %v222
    %v224 = vlaneseq
    %v225 = vshrl.u32 %v224, 7
    %v226 = vsub.s32 0, %v225
    %v227 = vrot.slane %v100, %v226
    %v228 = vlaneseq
    %v229 = vshrl.u32 %v228, 7
    %v230 = vsub.s32 1, %v229
    %v231 = vrot.slane %v100, %v230
    %v232 = vlaneseq
    %v233 = vshrl.u32 %v232, 7
    %v234 = vsub.s32 0, %v233
    %v235 = vrot.slane %v102, %v234
    %v236 = vlaneseq
    %v237 = vshrl.u32 %v236, 7
    %v238 = vsub.s32 1, %v237
    %v239 = vrot.slane %v102, %v238
    %v240 = vlaneseq
    %v241 = vshrl.u32 %v240, 7
    %v242 = vsub.s32 0, %v241
    %v243 = vrot.slane %v85, %v242
    %v244 = vlaneseq
    %v245 = vshrl.u32 %v244, 7
    %v246 = vsub.s32 1, %v245
    %v247 = vrot.slane %v85, %v246
    %v248 = vlaneseq
    %v249 = vshrl.u32 %v248, 7
    %v250 = vsub.s32 0, %v249
    %v251 = vrot.slane %v99, %v250
    %v252 = vlaneseq
    %v253 = vshrl.u32 %v252, 7
    %v254 = vsub.s32 1, %v253
    %v255 = vrot.slane %v99, %v254
    %v256 = vlaneseq
    %v257 = vshrl.u32 %v256, 7
    %v258 = vsub.s32 0, %v257
    %v259 = vrot.slane %v101, %v258
    %v260 = vlaneseq
    %v261 = vshrl.u32 %v260, 7
    %v262 = vsub.s32 1, %v261
    %v263 = vrot.slane %v101, %v262
    %v264 = vlaneseq
    %v265 = vshrl.u32 %v264, 7
    %v266 = vsub.s32 0, %v265
    %v267 = vrot.slane %v103, %v266
    %v268 = vlaneseq
    %v269 = vshrl.u32 %v268, 7
    %v270 = vsub.s32 1, %v269
    %v271 = vrot.slane %v103, %v270
    %v288 = vlaneseq
    %v289 = vshrl.u32 %v288, 7
    %v290 = vsub.s32 0, %v289
    %v291 = vrot.slane %v130, %v290
    %v292 = vlaneseq
    %v293 = vshrl.u32 %v292, 7
    %v294 = vsub.s32 1, %v293
    %v295 = vrot.slane %v130, %v294
    %v296 = vlaneseq
    %v297 = vshrl.u32 %v296, 7
    %v298 = vsub.s32 0, %v297
    %v299 = vrot.slane %v144, %v298
    %v300 = vlaneseq
    %v301 = vshrl.u32 %v300, 7
    %v302 = vsub.s32 1, %v301
    %v303 = vrot.slane %v144, %v302
    %v304 = vlaneseq
    %v305 = vshrl.u32 %v304, 7
    %v306 = vsub.s32 0, %v305
    %v307 = vrot.slane %v152, %v306
    %v308 = vlaneseq
    %v309 = vshrl.u32 %v308, 7
    %v310 = vsub.s32 1, %v309
    %v311 = vrot.slane %v152, %v310
    %v312 = vlaneseq
    %v313 = vshrl.u32 %v312, 7
    %v314 = vsub.s32 0, %v313
    %v315 = vrot.slane %v154, %v314
    %v316 = vlaneseq
    %v317 = vshrl.u32 %v316, 7
    %v318 = vsub.s32 1, %v317
    %v319 = vrot.slane %v154, %v318
    %v320 = vlaneseq
    %v321 = vshrl.u32 %v320, 7
    %v322 = vsub.s32 0, %v321
    %v323 = vrot.slane %v137, %v322
    %v324 = vlaneseq
    %v325 = vshrl.u32 %v324, 7
    %v326 = vsub.s32 1, %v325
    %v327 = vrot.slane %v137, %v326
    %v328 = vlaneseq
    %v329 = vshrl.u32 %v328, 7
    %v330 = vsub.s32 0, %v329
    %v331 = vrot.slane %v151, %v330
    %v332 = vlaneseq
    %v333 = vshrl.u32 %v332, 7
    %v334 = vsub.s32 1, %v333
    %v335 = vrot.slane %v151, %v334
    %v336 = vlaneseq
    %v337 = vshrl.u32 %v336, 7
    %v338 = vsub.s32 0, %v337
    %v339 = vrot.slane %v153, %v338
    %v340 = vlaneseq
    %v341 = vshrl.u32 %v340, 7
    %v342 = vsub.s32 1, %v341
    %v343 = vrot.slane %v153, %v342
    %v344 = vlaneseq
    %v345 = vshrl.u32 %v344, 7
    %v346 = vsub.s32 0, %v345
    %v347 = vrot.slane %v155, %v346
    %v348 = vlaneseq
    %v349 = vshrl.u32 %v348, 7
    %v350 = vsub.s32 1, %v349
    %v351 = vrot.slane %v155, %v350
    %v368 = vlaneseq
    %v369 = vshrl.u32 %v368, 7
    %v370 = vsub.s32 0, %v369
    %v371 = vrot.slane %v182, %v370
    %v372 = vlaneseq
    %v373 = vshrl.u32 %v372, 7
    %v374 = vsub.s32 1, %v373
    %v375 = vrot.slane %v182, %v374
    %v376 = vlaneseq
    %v377 = vshrl.u32 %v376, 7
    %v378 = vsub.s32 0, %v377
    %v379 = vrot.slane %v196, %v378
    %v380 = vlaneseq
    %v381 = vshrl.u32 %v380, 7
    %v382 = vsub.s32 1, %v381
    %v383 = vrot.slane %v196, %v382
    %v384 = vlaneseq
    %v385 = vshrl.u32 %v384, 7
    %v386 = vsub.s32 0, %v385
    %v387 = vrot.slane %v204, %v386
    %v388 = vlaneseq
    %v389 = vshrl.u32 %v388, 7
    %v390 = vsub.s32 1, %v389
    %v391 = vrot.slane %v204, %v390
    %v392 = vlaneseq
    %v393 = vshrl.u32 %v392, 7
    %v394 = vsub.s32 0, %v393
    %v395 = vrot.slane %v206, %v394
    %v396 = vlaneseq
    %v397 = vshrl.u32 %v396, 7
    %v398 = vsub.s32 1, %v397
    %v399 = vrot.slane %v206, %v398
    %v400 = vlaneseq
    %v401 = vshrl.u32 %v400, 7
    %v402 = vsub.s32 0, %v401
    %v403 = vrot.slane %v189, %v402
    %v404 = vlaneseq
    %v405 = vshrl.u32 %v404, 7
    %v406 = vsub.s32 1, %v405
    %v407 = vrot.slane %v189, %v406
    %v408 = vlaneseq
    %v409 = vshrl.u32 %v408, 7
    %v410 = vsub.s32 0, %v409
    %v411 = vrot.slane %v203, %v410
    %v412 = vlaneseq
    %v413 = vshrl.u32 %v412, 7
    %v414 = vsub.s32 1, %v413
    %v415 = vrot.slane %v203, %v414
    %v416 = vlaneseq
    %v417 = vshrl.u32 %v416, 7
    %v418 = vsub.s32 0, %v417
    %v419 = vrot.slane %v205, %v418
    %v420 = vlaneseq
    %v421 = vshrl.u32 %v420, 7
    %v422 = vsub.s32 1, %v421
    %v423 = vrot.slane %v205, %v422
    %v424 = vlaneseq
    %v425 = vshrl.u32 %v424, 7
    %v426 = vsub.s32 0, %v425
    %v427 = vrot.slane %v207, %v426
    %v428 = vlaneseq
    %v429 = vshrl.u32 %v428, 7
    %v430 = vsub.s32 1, %v429
    %v431 = vrot.slane %v207, %v430
    %vm448 = vcmask 1040384
    %v449 = vsel %vm448, %v211, %v291
    %v450 = vsel %vm448, %v215, %v295
    %v451 = vsel %vm448, %v219, %v299
    %v452 = vsel %vm448, %v223, %v303
    %v453 = vsel %vm448, %v227, %v307
    %v454 = vsel %vm448, %v231, %v311
    %v455 = vsel %vm448, %v235, %v315
    %v456 = vsel %vm448, %v239, %v319
    %v457 = vsel %vm448, %v243, %v323
    %v458 = vsel %vm448, %v247, %v327
    %v459 = vsel %vm448, %v251, %v331
    %v460 = vsel %vm448, %v255, %v335
    %v461 = vsel %vm448, %v259, %v339
    %v462 = vsel %vm448, %v263, %v343
    %v463 = vsel %vm448, %v267, %v347
    %v464 = vsel %vm448, %v271, %v351
    %vm465 = vcmask 1041408
    %v466 = vsel %vm465, %v449, %v371
    %v467 = vsel %vm465, %v450, %v375
    %v468 = vsel %vm465, %v451, %v379
    %v469 = vsel %vm465, %v452, %v383
    %v470 = vsel %vm465, %v453, %v387
    %v471 = vsel %vm465, %v454, %v391
    %v472 = vsel %vm465, %v455, %v395
    %v473 = vsel %vm465, %v456, %v399
    %v474 = vsel %vm465, %v457, %v403
    %v475 = vsel %vm465, %v458, %v407
    %v476 = vsel %vm465, %v459, %v411
    %v477 = vsel %vm465, %v460, %v415
    %v478 = vsel %vm465, %v461, %v419
    %v479 = vsel %vm465, %v462, %v423
    %v480 = vsel %vm465, %v463, %v427
    %v481 = vsel %vm465, %v464, %v431
    %vm482 = vcmp.gt.f32.partialorder %v466, 0.0
    %vm483 = vcmp.gt.f32.partialorder %v467, 0.0
    %vm484 = vcmp.gt.f32.partialorder %v468, 0.0
    %vm485 = vcmp.gt.f32.partialorder %v469, 0.0
    %vm486 = vcmp.gt.f32.partialorder %v470, 0.0
    %vm487 = vcmp.gt.f32.partialorder %v471, 0.0
    %vm488 = vcmp.gt.f32.partialorder %v472, 0.0
    %vm489 = vcmp.gt.f32.partialorder %v473, 0.0
    %vm490 = vcmp.gt.f32.partialorder %v474, 0.0
    %vm491 = vcmp.gt.f32.partialorder %v475, 0.0
    %vm492 = vcmp.gt.f32.partialorder %v476, 0.0
    %vm493 = vcmp.gt.f32.partialorder %v477, 0.0
    %vm494 = vcmp.gt.f32.partialorder %v478, 0.0
    %vm495 = vcmp.gt.f32.partialorder %v479, 0.0
    %vm496 = vcmp.gt.f32.partialorder %v480, 0.0
    %vm497 = vcmp.gt.f32.partialorder %v481, 0.0
    %v498 = vmul.f32 %v466, 0.7
    %v499 = vmul.f32 %v467, 0.7
    %v500 = vmul.f32 %v468, 0.7
    %v501 = vmul.f32 %v469, 0.7
    %v502 = vmul.f32 %v470, 0.7
    %v503 = vmul.f32 %v471, 0.7
    %v504 = vmul.f32 %v472, 0.7
    %v505 = vmul.f32 %v473, 0.7
    %v506 = vmul.f32 %v474, 0.7
    %v507 = vmul.f32 %v475, 0.7
    %v508 = vmul.f32 %v476, 0.7
    %v509 = vmul.f32 %v477, 0.7
    %v510 = vmul.f32 %v478, 0.7
    %v511 = vmul.f32 %v479, 0.7
    %v512 = vmul.f32 %v480, 0.7
    %v513 = vmul.f32 %v481, 0.7
    %v514 = vsel %vm482, %v466, %v498
    %v515 = vsel %vm483, %v467, %v499
    %v516 = vsel %vm484, %v468, %v500
    %v517 = vsel %vm485, %v469, %v501
    %v518 = vsel %vm486, %v470, %v502
    %v519 = vsel %vm487, %v471, %v503
    %v520 = vsel %vm488, %v472, %v504
    %v521 = vsel %vm489, %v473, %v505
    %v522 = vsel %vm490, %v474, %v506
    %v523 = vsel %vm491, %v475, %v507
    %v524 = vsel %vm492, %v476, %v508
    %v525 = vsel %vm493, %v477, %v509
    %v526 = vsel %vm494, %v478, %v510
    %v527 = vsel %vm495, %v479, %v511
    %v528 = vsel %vm496, %v480, %v512
    %v529 = vsel %vm497, %v481, %v513
    %v546 = vcombine.low %v514, %v515
    %v547 = vcombine.low %v516, %v517
    %v548 = vcombine.low %v518, %v519
    %v549 = vcombine.low %v520, %v521
    %v550 = vcombine.low %v522, %v523
    %v551 = vcombine.low %v524, %v525
    %v552 = vcombine.low %v526, %v527
    %v553 = vcombine.low %v528, %v529
    %562 = vst [vmem:[%s2] sm:$0x77] %v546
    %563 = vst [vmem:[%s2 + $0x8] sm:$0x77] %v547
    %564 = vst [vmem:[%s2 + $0x10] sm:$0x77] %v548
    %565 = vst [vmem:[%s2 + $0x18] sm:$0x77] %v549
    %566 = vst [vmem:[%s2 + $0x20] sm:$0x77] %v550
    %567 = vst [vmem:[%s2 + $0x28] sm:$0x77] %v551
    %568 = vst [vmem:[%s2 + $0x30] sm:$0x77] %v552
    %569 = vst [vmem:[%s2 + $0x38] sm:$0x77] %v553
    %586 = vrot.lane.b32.xlu0 %v466, 127
    %v587 = vpop.permute.xlu0 %586
    %588 = vrot.lane.b32.xlu0 %v467, 127
    %v589 = vpop.permute.xlu0 %588
    %590 = vrot.lane.b32.xlu0 %v468, 127
    %v591 = vpop.permute.xlu0 %590
    %592 = vrot.lane.b32.xlu0 %v469, 127
    %v593 = vpop.permute.xlu0 %592
    %594 = vrot.lane.b32.xlu0 %v470, 127
    %v595 = vpop.permute.xlu0 %594
    %596 = vrot.lane.b32.xlu0 %v471, 127
    %v597 = vpop.permute.xlu0 %596
    %598 = vrot.lane.b32.xlu0 %v472, 127
    %v599 = vpop.permute.xlu0 %598
    %600 = vrot.lane.b32.xlu0 %v473, 127
    %v601 = vpop.permute.xlu0 %600
    %602 = vrot.lane.b32.xlu0 %v474, 127
    %v603 = vpop.permute.xlu0 %602
    %604 = vrot.lane.b32.xlu0 %v475, 127
    %v605 = vpop.permute.xlu0 %604
    %606 = vrot.lane.b32.xlu0 %v476, 127
    %v607 = vpop.permute.xlu0 %606
    %608 = vrot.lane.b32.xlu0 %v477, 127
    %v609 = vpop.permute.xlu0 %608
    %610 = vrot.lane.b32.xlu0 %v478, 127
    %v611 = vpop.permute.xlu0 %610
    %612 = vrot.lane.b32.xlu0 %v479, 127
    %v613 = vpop.permute.xlu0 %612
    %614 = vrot.lane.b32.xlu0 %v480, 127
    %v615 = vpop.permute.xlu0 %614
    %616 = vrot.lane.b32.xlu0 %v481, 127
    %v617 = vpop.permute.xlu0 %616
    %vm618 = vcmask 1039360
    %v619 = vsel %vm618, %v587, %v589
    %v620 = vsel %vm618, %v591, %v593
    %v621 = vsel %vm618, %v595, %v597
    %v622 = vsel %vm618, %v599, %v601
    %v623 = vsel %vm618, %v603, %v605
    %v624 = vsel %vm618, %v607, %v609
    %v625 = vsel %vm618, %v611, %v613
    %v626 = vsel %vm618, %v615, %v617
    %v651 = vsel %vm618, %v589, %v587
    %v652 = vsel %vm618, %v593, %v591
    %v653 = vsel %vm618, %v597, %v595
    %v654 = vsel %vm618, %v601, %v599
    %v655 = vsel %vm618, %v605, %v603
    %v656 = vsel %vm618, %v609, %v607
    %v657 = vsel %vm618, %v613, %v611
    %v658 = vsel %vm618, %v617, %v615
    %v659 = vadd.f32 %v466, %v619
    %v660 = vadd.f32 %v467, %v651
    %v661 = vadd.f32 %v468, %v620
    %v662 = vadd.f32 %v469, %v652
    %v663 = vadd.f32 %v470, %v621
    %v664 = vadd.f32 %v471, %v653
    %v665 = vadd.f32 %v472, %v622
    %v666 = vadd.f32 %v473, %v654
    %v667 = vadd.f32 %v474, %v623
    %v668 = vadd.f32 %v475, %v655
    %v669 = vadd.f32 %v476, %v624
    %v670 = vadd.f32 %v477, %v656
    %v671 = vadd.f32 %v478, %v625
    %v672 = vadd.f32 %v479, %v657
    %v673 = vadd.f32 %v480, %v626
    %v674 = vadd.f32 %v481, %v658
    %691 = vrot.lane.b32.xlu0 %v659, 112
    %v692 = vpop.permute.xlu0 %691
    %693 = vrot.lane.b32.xlu0 %v660, 112
    %v694 = vpop.permute.xlu0 %693
    %695 = vrot.lane.b32.xlu0 %v661, 112
    %v696 = vpop.permute.xlu0 %695
    %697 = vrot.lane.b32.xlu0 %v662, 112
    %v698 = vpop.permute.xlu0 %697
    %699 = vrot.lane.b32.xlu0 %v663, 112
    %v700 = vpop.permute.xlu0 %699
    %701 = vrot.lane.b32.xlu0 %v664, 112
    %v702 = vpop.permute.xlu0 %701
    %703 = vrot.lane.b32.xlu0 %v665, 112
    %v704 = vpop.permute.xlu0 %703
    %705 = vrot.lane.b32.xlu0 %v666, 112
    %v706 = vpop.permute.xlu0 %705
    %707 = vrot.lane.b32.xlu0 %v667, 112
    %v708 = vpop.permute.xlu0 %707
    %709 = vrot.lane.b32.xlu0 %v668, 112
    %v710 = vpop.permute.xlu0 %709
    %711 = vrot.lane.b32.xlu0 %v669, 112
    %v712 = vpop.permute.xlu0 %711
    %713 = vrot.lane.b32.xlu0 %v670, 112
    %v714 = vpop.permute.xlu0 %713
    %715 = vrot.lane.b32.xlu0 %v671, 112
    %v716 = vpop.permute.xlu0 %715
    %717 = vrot.lane.b32.xlu0 %v672, 112
    %v718 = vpop.permute.xlu0 %717
    %719 = vrot.lane.b32.xlu0 %v673, 112
    %v720 = vpop.permute.xlu0 %719
    %721 = vrot.lane.b32.xlu0 %v674, 112
    %v722 = vpop.permute.xlu0 %721
    %vm723 = vcmask 916480
    %v724 = vsel %vm723, %v692, %v694
    %v725 = vsel %vm723, %v696, %v698
    %v726 = vsel %vm723, %v700, %v702
    %v727 = vsel %vm723, %v704, %v706
    %v728 = vsel %vm723, %v708, %v710
    %v729 = vsel %vm723, %v712, %v714
    %v730 = vsel %vm723, %v716, %v718
    %v731 = vsel %vm723, %v720, %v722
    %v756 = vsel %vm723, %v694, %v692
    %v757 = vsel %vm723, %v698, %v696
    %v758 = vsel %vm723, %v702, %v700
    %v759 = vsel %vm723, %v706, %v704
    %v760 = vsel %vm723, %v710, %v708
    %v761 = vsel %vm723, %v714, %v712
    %v762 = vsel %vm723, %v718, %v716
    %v763 = vsel %vm723, %v722, %v720
    %v764 = vadd.f32 %v659, %v724
    %v765 = vadd.f32 %v660, %v756
    %v766 = vadd.f32 %v661, %v725
    %v767 = vadd.f32 %v662, %v757
    %v768 = vadd.f32 %v663, %v726
    %v769 = vadd.f32 %v664, %v758
    %v770 = vadd.f32 %v665, %v727
    %v771 = vadd.f32 %v666, %v759
    %v772 = vadd.f32 %v667, %v728
    %v773 = vadd.f32 %v668, %v760
    %v774 = vadd.f32 %v669, %v729
    %v775 = vadd.f32 %v670, %v761
    %v776 = vadd.f32 %v671, %v730
    %v777 = vadd.f32 %v672, %v762
    %v778 = vadd.f32 %v673, %v731
    %v779 = vadd.f32 %v674, %v763
    %v780 = vmul.f32 %v764, 0.25
    %v781 = vmul.f32 %v765, 0.25
    %v782 = vmul.f32 %v766, 0.25
    %v783 = vmul.f32 %v767, 0.25
    %v784 = vmul.f32 %v768, 0.25
    %v785 = vmul.f32 %v769, 0.25
    %v786 = vmul.f32 %v770, 0.25
    %v787 = vmul.f32 %v771, 0.25
    %v788 = vmul.f32 %v772, 0.25
    %v789 = vmul.f32 %v773, 0.25
    %v790 = vmul.f32 %v774, 0.25
    %v791 = vmul.f32 %v775, 0.25
    %v792 = vmul.f32 %v776, 0.25
    %v793 = vmul.f32 %v777, 0.25
    %v794 = vmul.f32 %v778, 0.25
    %v795 = vmul.f32 %v779, 0.25
    %v812 = vcombine.low %v780, %v781
    %v813 = vcombine.low %v782, %v783
    %v814 = vcombine.low %v784, %v785
    %v815 = vcombine.low %v786, %v787
    %v816 = vcombine.low %v788, %v789
    %v817 = vcombine.low %v790, %v791
    %v818 = vcombine.low %v792, %v793
    %v819 = vcombine.low %v794, %v795
    %828 = vst [vmem:[%s3] sm:$0x77] %v812
    %829 = vst [vmem:[%s3 + $0x8] sm:$0x77] %v813
    %830 = vst [vmem:[%s3 + $0x10] sm:$0x77] %v814
    %831 = vst [vmem:[%s3 + $0x18] sm:$0x77] %v815
    %832 = vst [vmem:[%s3 + $0x20] sm:$0x77] %v816
    %833 = vst [vmem:[%s3 + $0x28] sm:$0x77] %v817
    %834 = vst [vmem:[%s3 + $0x30] sm:$0x77] %v818
    %835 = vst [vmem:[%s3 + $0x38] sm:$0x77] %v819
    // Predicated region
    $region14: #{model_forward.1} parent=1 // pred_check
      _
    $region15: #{model_forward.1} parent=1 // pred_check_branch
      %837 = sbr.rel (0) target = $region17
    $region16: #{model_forward.1} parent=1 // pred_region
      _
    $region17: #{model_forward.1} parent=1 // pred_fallthru
      _
    // Predicated region
    $region18: #{model_forward.1} parent=1 // pred_check
      _
    $region19: #{model_forward.1} parent=1 // pred_check_branch
      %839 = sbr.rel (0) target = $region21
    $region20: #{model_forward.1} parent=1 // pred_region
      _
    $region21: #{model_forward.1} parent=1 // pred_fallthru
      _
    // Predicated region
    $region22: #{model_forward.1} parent=1 // pred_check
      _
    $region23: #{model_forward.1} parent=1 // pred_check_branch
      %841 = sbr.rel (0) target = $region25
    $region24: #{model_forward.1} parent=1 // pred_region
      _
    $region25: #{model_forward.1} parent=1 // pred_fallthru
      _
    // Predicated region
    $region26: #{model_forward.1} parent=1 // pred_check
      _
    $region27: #{model_forward.1} parent=1 // pred_check_branch
      %843 = sbr.rel (0) target = $region29
    $region28: #{model_forward.1} parent=1 // pred_region
      _
    $region29: #{model_forward.1} parent=1 // pred_fallthru
      _
    %844 = vsyncpa [#allocation3], 1

</llo_original>
